<compile_context>
chip_gen: v6e
topology: v6e:2x2x1
jax: 0.10.0
libtpu: 0.0.40
codegen_flags: <defaults>
</compile_context>

<pallas_src>
import jax
import jax.numpy as jnp
from jax.experimental import pallas as pl
from jax.experimental.pallas import tpu as pltpu


def _integral_attention_kernel(x_ref, ln_ref, w_ref, b_ref, u_ref, o_ref):
    # x_ref : (W, Cin*R)  f32      R = B*H
    # ln_ref: (W, 4)      f32      cols = [gamma_v, beta_v, gamma_k, beta_k]
    # w_ref : (6*Cin*R + 6*Ch*R, Ch*R) bf16   kron-expanded conv weights
    # b_ref : (4, Ch*R)   f32      rows = [bv, bk, bc, bo(padded)] repeated over R
    # u_ref : (W, M)      bf16
    # o_ref : (W, Ch*R)   f32      first Cin*R lanes are the real output
    Wd, cri = x_ref.shape
    crh = b_ref.shape[1]

    x = x_ref[...]                       # (W, Cin*R) f32
    u = u_ref[...]                       # (W, M)     bf16

    # boundary masks along the freq (sublane) axis
    sub = jax.lax.broadcasted_iota(jnp.int32, (Wd, 1), 0)
    sub_first = sub == 0
    sub_last = sub == Wd - 1

    def conv1x3(t, w_big, bias_row):
        # t: (W, Ci*R) f32; w_big: (3*Ci*R, Co*R) bf16; bias_row: (1, Co*R) f32
        t_m1 = jnp.where(sub_first, 0.0, pltpu.roll(t, 1, axis=0))       # x[w-1]
        t_p1 = jnp.where(sub_last, 0.0, pltpu.roll(t, Wd - 1, axis=0))   # x[w+1]
        stacked = jnp.concatenate([t_m1, t, t_p1], axis=1).astype(jnp.bfloat16)
        out = jnp.dot(stacked, w_big, preferred_element_type=jnp.float32)
        return out + bias_row                                            # (W, Co*R)

    def layer_norm(t, g_col, b_col, eps=1e-5):
        # normalize over the freq (sublane) axis, single-pass stats, f32
        mean = jnp.mean(t, axis=0, keepdims=True)
        var = jnp.mean(t * t, axis=0, keepdims=True) - mean * mean
        return (t - mean) * jax.lax.rsqrt(var + eps) * g_col + b_col

    ln_v = layer_norm(x, ln_ref[:, 0:1], ln_ref[:, 1:2])          # (W, Cin*R)
    ln_k = layer_norm(x * x, ln_ref[:, 2:3], ln_ref[:, 3:4])      # (W, Cin*R)

    # static row offsets into the packed kron weights
    r1 = 3 * cri
    r2 = 6 * cri
    r3 = 6 * cri + 3 * crh
    r4 = 6 * cri + 6 * crh

    v = conv1x3(ln_v, w_ref[0:r1, :], b_ref[0:1, :])              # (W, Ch*R)
    k = conv1x3(ln_k, w_ref[r1:r2, :], b_ref[1:2, :])             # (W, Ch*R)

    # atten = softmax_m( sum_w k[w, :] * u[w, m] )  ->  (M, Ch*R)
    att = jax.lax.dot_general(
        u, k.astype(jnp.bfloat16),
        (((0,), (0,)), ((), ())),
        preferred_element_type=jnp.float32)
    att = att - jnp.max(att, axis=0, keepdims=True)
    p = jnp.exp(att)
    att = p * pl.reciprocal(jnp.sum(p, axis=0, keepdims=True), approx=True)

    # H = u @ atten : (W, Ch*R)
    h = jnp.dot(u, att.astype(jnp.bfloat16), preferred_element_type=jnp.float32)

    choosed = conv1x3(h, w_ref[r2:r3, :], b_ref[2:3, :])          # (W, Ch*R)
    gated = choosed * v
    out = conv1x3(gated, w_ref[r3:r4, :], b_ref[3:4, :])          # (W, Ch*R), padded Co
    o_ref[...] = out.astype(o_ref.dtype)


def integral_attention_pallas(x_nchw, params):
    B, Cin, Hs, Wd = x_nchw.shape
    R = B * Hs
    Ch = params["wv"].shape[0]

    # input layout: (W, Cin*R) with lane index = c*(B*H) + b*H + h
    x_t = jnp.transpose(x_nchw, (3, 1, 0, 2)).reshape(Wd, Cin * R)

    # packed LayerNorm params: (W, 4)
    ln_pack = jnp.stack([params["gamma_v"], params["beta_v"],
                         params["gamma_k"], params["beta_k"]], axis=1)

    # conv weights (Co, Ci, 3) -> (3*Ci*R, Co*R) = taps stacked on rows,
    # each tap = kron(w_tap^T, I_R) so B*H is folded into a single matmul.
    eye_r = jnp.eye(R, dtype=jnp.float32)

    def big_w(w):
        return jnp.concatenate(
            [jnp.kron(w[:, :, tap].T, eye_r) for tap in range(3)], axis=0)

    # pad the final conv's output channels to Ch so the kernel output stays
    # lane-dense; the extra channels are exactly zero and sliced off below.
    wo_pad = jnp.zeros((Ch, Ch, 3), jnp.float32).at[:Cin].set(params["wo"])
    w_pack = jnp.concatenate(
        [big_w(params["wv"]), big_w(params["wk"]),
         big_w(params["wc"]), big_w(wo_pad)], axis=0).astype(jnp.bfloat16)

    bo_pad = jnp.zeros((Ch,), jnp.float32).at[:Cin].set(params["bo"])
    b_pack = jnp.stack([jnp.repeat(params["bv"], R),
                        jnp.repeat(params["bk"], R),
                        jnp.repeat(params["bc"], R),
                        jnp.repeat(bo_pad, R)], axis=0)            # (4, Ch*R)

    u_bf = params["u"].astype(jnp.bfloat16)                        # (W, M)

    out_t = pl.pallas_call(
        _integral_attention_kernel,
        out_shape=jax.ShapeDtypeStruct((Wd, Ch * R), jnp.float32),
        grid=(1,),
        in_specs=[
            pl.BlockSpec(x_t.shape, lambda i: (0, 0)),
            pl.BlockSpec(ln_pack.shape, lambda i: (0, 0)),
            pl.BlockSpec(w_pack.shape, lambda i: (0, 0)),
            pl.BlockSpec(b_pack.shape, lambda i: (0, 0)),
            pl.BlockSpec(u_bf.shape, lambda i: (0, 0)),
        ],
        out_specs=pl.BlockSpec((Wd, Ch * R), lambda i: (0, 0)),
        compiler_params=pltpu.CompilerParams(
            dimension_semantics=("parallel",),
            vmem_limit_bytes=32 * 1024 * 1024,
        ),
    )(x_t, ln_pack, w_pack, b_pack, u_bf)

    # (W, Ch*R) -> real Cin channels -> NCHW
    out = out_t[:, :Cin * R].reshape(Wd, Cin, B, Hs)
    return jnp.transpose(out, (2, 1, 3, 0))


def integral_attention_reference(x, params):
    # Pure-JAX NCHW reference of the PyTorch forward (f32 everywhere).
    W = x.shape[-1]

    def ln(t, g, b, eps=1e-5):
        mean = t.mean(-1, keepdims=True)
        var = ((t - mean) ** 2).mean(-1, keepdims=True)
        return (t - mean) / jnp.sqrt(var + eps) * g + b

    def conv(t, w, b):
        tp = jnp.pad(t, ((0, 0), (0, 0), (0, 0), (1, 1)))
        out = (jnp.einsum("oi,bihw->bohw", w[:, :, 0], tp[..., 0:W])
               + jnp.einsum("oi,bihw->bohw", w[:, :, 1], tp[..., 1:W + 1])
               + jnp.einsum("oi,bihw->bohw", w[:, :, 2], tp[..., 2:W + 2]))
        return out + b[None, :, None, None]

    v = conv(ln(x, params["gamma_v"], params["beta_v"]), params["wv"], params["bv"])
    k = conv(ln(x * x, params["gamma_k"], params["beta_k"]), params["wk"], params["bk"])
    u = params["u"]
    att = jnp.einsum("bchw,wm->bchm", k, u)
    att = jax.nn.softmax(att, axis=-1)
    h_mat = jnp.einsum("bchm,mw->bchw", att, u.T)
    choosed = conv(h_mat, params["wc"], params["bc"])
    return conv(choosed * v, params["wo"], params["bo"])


if __name__ == "__main__":
    B, in_ch, n_head, Hs, freq_dim, M = 2, 4, 2, 8, 16, 8
    Ch = in_ch * n_head
    key = jax.random.PRNGKey(0)
    ks = jax.random.split(key, 16)
    f32 = jnp.float32
    params = dict(
        gamma_v=1.0 + 0.1 * jax.random.normal(ks[0], (freq_dim,), f32),
        beta_v=0.1 * jax.random.normal(ks[1], (freq_dim,), f32),
        gamma_k=1.0 + 0.1 * jax.random.normal(ks[2], (freq_dim,), f32),
        beta_k=0.1 * jax.random.normal(ks[3], (freq_dim,), f32),
        wv=0.2 * jax.random.normal(ks[4], (Ch, in_ch, 3), f32),
        bv=0.1 * jax.random.normal(ks[5], (Ch,), f32),
        wk=0.2 * jax.random.normal(ks[6], (Ch, in_ch, 3), f32),
        bk=0.1 * jax.random.normal(ks[7], (Ch,), f32),
        wc=0.2 * jax.random.normal(ks[8], (Ch, Ch, 3), f32),
        bc=0.1 * jax.random.normal(ks[9], (Ch,), f32),
        wo=0.2 * jax.random.normal(ks[10], (in_ch, Ch, 3), f32),
        bo=0.1 * jax.random.normal(ks[11], (in_ch,), f32),
        # TODO(synk): original module loads the U basis from a .npy file; here
        # it is a deterministic synthetic (freq_dim, M) buffer.
        u=0.5 * jax.random.normal(ks[12], (freq_dim, M), f32),
    )
    x = jax.random.normal(ks[13], (B, in_ch, Hs, freq_dim), f32)

    fwd = jax.jit(integral_attention_pallas)
    out = jax.block_until_ready(fwd(x, params))

    ref = integral_attention_reference(x, params)
    assert out.shape == (B, in_ch, Hs, freq_dim)
    err = float(jnp.max(jnp.abs(out - ref)))
    # tolerance loosened from 2e-2: MXU operands are bf16 (f32 accumulation)
    # per the per-generation performance guidance; LN/softmax stay f32.
    assert err < 5e-2, f"max abs err too large: {err}"
    print("KERNEL_OK")
</pallas_src>

<mosaic_0001>
module attributes {stable_mosaic.version = 11 : i64} {
  func.func @_integral_attention_kernel(%arg0: i32, %arg1: memref<16x64xf32, #tpu.memory_space<vmem>>, %arg2: memref<16x4xf32, #tpu.memory_space<vmem>>, %arg3: memref<1152x128xbf16, #tpu.memory_space<vmem>>, %arg4: memref<4x128xf32, #tpu.memory_space<vmem>>, %arg5: memref<16x8xbf16, #tpu.memory_space<vmem>>, %arg6: memref<16x128xf32, #tpu.memory_space<vmem>>) attributes {dimension_semantics = [#tpu.dimension_semantics<parallel>], iteration_bounds = array<i64: 1>, scalar_prefetch = 0 : i64, scratch_operands = 0 : i64, tpu.core_type = #tpu.core_type<tc>, window_params = [{pipeline_mode = #tpu.pipeline_mode<synchronous>, transform_indices = @transform_0, window_bounds = array<i64: 16, 64>}, {pipeline_mode = #tpu.pipeline_mode<synchronous>, transform_indices = @transform_1, window_bounds = array<i64: 16, 4>}, {pipeline_mode = #tpu.pipeline_mode<synchronous>, transform_indices = @transform_2, window_bounds = array<i64: 1152, 128>}, {pipeline_mode = #tpu.pipeline_mode<synchronous>, transform_indices = @transform_3, window_bounds = array<i64: 4, 128>}, {pipeline_mode = #tpu.pipeline_mode<synchronous>, transform_indices = @transform_4, window_bounds = array<i64: 16, 8>}, {pipeline_mode = #tpu.pipeline_mode<synchronous>, transform_indices = @transform_5, window_bounds = array<i64: 16, 128>}]} {
    %c0 = arith.constant 0 : index
    %c0_0 = arith.constant 0 : index
    %0 = vector.load %arg1[%c0, %c0_0] : memref<16x64xf32, #tpu.memory_space<vmem>>, vector<16x64xf32>
    %c0_1 = arith.constant 0 : index
    %c0_2 = arith.constant 0 : index
    %1 = vector.load %arg5[%c0_1, %c0_2] : memref<16x8xbf16, #tpu.memory_space<vmem>>, vector<16x8xbf16>
    %2 = tpu.iota {dimensions = array<i32: 0>} : vector<16x1xi32>
    %c0_i32 = arith.constant 0 : i32
    %3 = vector.broadcast %c0_i32 : i32 to vector<16x1xi32>
    %4 = arith.cmpi eq, %2, %3 : vector<16x1xi32>
    %c15_i32 = arith.constant 15 : i32
    %5 = vector.broadcast %c15_i32 : i32 to vector<16x1xi32>
    %6 = arith.cmpi eq, %2, %5 : vector<16x1xi32>
    %c0_3 = arith.constant 0 : index
    %c0_4 = arith.constant 0 : index
    %7 = vector.load %arg2[%c0_3, %c0_4] : memref<16x4xf32, #tpu.memory_space<vmem>>, vector<16x1xf32>
    %c0_5 = arith.constant 0 : index
    %c1 = arith.constant 1 : index
    %8 = vector.load %arg2[%c0_5, %c1] : memref<16x4xf32, #tpu.memory_space<vmem>>, vector<16x1xf32>
    %cst = arith.constant dense<0.000000e+00> : vector<64xf32>
    %9 = vector.multi_reduction <add>, %0, %cst [0] : vector<16x64xf32> to vector<64xf32>
    %10 = vector.shape_cast %9 : vector<64xf32> to vector<1x64xf32>
    %cst_6 = arith.constant 1.600000e+01 : f32
    %11 = vector.broadcast %cst_6 : f32 to vector<1x64xf32>
    %12 = arith.divf %10, %11 : vector<1x64xf32>
    %13 = arith.mulf %0, %0 : vector<16x64xf32>
    %cst_7 = arith.constant dense<0.000000e+00> : vector<64xf32>
    %14 = vector.multi_reduction <add>, %13, %cst_7 [0] : vector<16x64xf32> to vector<64xf32>
    %15 = vector.shape_cast %14 : vector<64xf32> to vector<1x64xf32>
    %cst_8 = arith.constant 1.600000e+01 : f32
    %16 = vector.broadcast %cst_8 : f32 to vector<1x64xf32>
    %17 = arith.divf %15, %16 : vector<1x64xf32>
    %18 = arith.mulf %12, %12 : vector<1x64xf32>
    %19 = arith.subf %17, %18 : vector<1x64xf32>
    %20 = vector.broadcast %12 : vector<1x64xf32> to vector<16x64xf32>
    %21 = arith.subf %0, %20 : vector<16x64xf32>
    %cst_9 = arith.constant 9.99999974E-6 : f32
    %22 = vector.broadcast %cst_9 : f32 to vector<1x64xf32>
    %23 = arith.addf %19, %22 : vector<1x64xf32>
    %24 = math.rsqrt %23 : vector<1x64xf32>
    %25 = vector.broadcast %24 : vector<1x64xf32> to vector<16x64xf32>
    %26 = arith.mulf %21, %25 : vector<16x64xf32>
    %27 = vector.broadcast %7 : vector<16x1xf32> to vector<16x64xf32>
    %28 = arith.mulf %26, %27 : vector<16x64xf32>
    %29 = vector.broadcast %8 : vector<16x1xf32> to vector<16x64xf32>
    %30 = arith.addf %28, %29 : vector<16x64xf32>
    %31 = arith.mulf %0, %0 : vector<16x64xf32>
    %c0_10 = arith.constant 0 : index
    %c2 = arith.constant 2 : index
    %32 = vector.load %arg2[%c0_10, %c2] : memref<16x4xf32, #tpu.memory_space<vmem>>, vector<16x1xf32>
    %c0_11 = arith.constant 0 : index
    %c3 = arith.constant 3 : index
    %33 = vector.load %arg2[%c0_11, %c3] : memref<16x4xf32, #tpu.memory_space<vmem>>, vector<16x1xf32>
    %cst_12 = arith.constant dense<0.000000e+00> : vector<64xf32>
    %34 = vector.multi_reduction <add>, %31, %cst_12 [0] : vector<16x64xf32> to vector<64xf32>
    %35 = vector.shape_cast %34 : vector<64xf32> to vector<1x64xf32>
    %cst_13 = arith.constant 1.600000e+01 : f32
    %36 = vector.broadcast %cst_13 : f32 to vector<1x64xf32>
    %37 = arith.divf %35, %36 : vector<1x64xf32>
    %38 = arith.mulf %31, %31 : vector<16x64xf32>
    %cst_14 = arith.constant dense<0.000000e+00> : vector<64xf32>
    %39 = vector.multi_reduction <add>, %38, %cst_14 [0] : vector<16x64xf32> to vector<64xf32>
    %40 = vector.shape_cast %39 : vector<64xf32> to vector<1x64xf32>
    %cst_15 = arith.constant 1.600000e+01 : f32
    %41 = vector.broadcast %cst_15 : f32 to vector<1x64xf32>
    %42 = arith.divf %40, %41 : vector<1x64xf32>
    %43 = arith.mulf %37, %37 : vector<1x64xf32>
    %44 = arith.subf %42, %43 : vector<1x64xf32>
    %45 = vector.broadcast %37 : vector<1x64xf32> to vector<16x64xf32>
    %46 = arith.subf %31, %45 : vector<16x64xf32>
    %cst_16 = arith.constant 9.99999974E-6 : f32
    %47 = vector.broadcast %cst_16 : f32 to vector<1x64xf32>
    %48 = arith.addf %44, %47 : vector<1x64xf32>
    %49 = math.rsqrt %48 : vector<1x64xf32>
    %50 = vector.broadcast %49 : vector<1x64xf32> to vector<16x64xf32>
    %51 = arith.mulf %46, %50 : vector<16x64xf32>
    %52 = vector.broadcast %32 : vector<16x1xf32> to vector<16x64xf32>
    %53 = arith.mulf %51, %52 : vector<16x64xf32>
    %54 = vector.broadcast %33 : vector<16x1xf32> to vector<16x64xf32>
    %55 = arith.addf %53, %54 : vector<16x64xf32>
    %c0_17 = arith.constant 0 : index
    %c0_18 = arith.constant 0 : index
    %56 = vector.load %arg3[%c0_17, %c0_18] : memref<1152x128xbf16, #tpu.memory_space<vmem>>, vector<192x128xbf16>
    %c0_19 = arith.constant 0 : index
    %c0_20 = arith.constant 0 : index
    %57 = vector.load %arg4[%c0_19, %c0_20] : memref<4x128xf32, #tpu.memory_space<vmem>>, vector<1x128xf32>
    %c1_i32 = arith.constant 1 : i32
    %58 = tpu.dynamic_rotate %30 by %c1_i32 dim 0 : vector<16x64xf32>, i32 -> vector<16x64xf32>
    %cst_21 = arith.constant 0.000000e+00 : f32
    %59 = vector.shape_cast %4 : vector<16x1xi1> to vector<16x1xi1>
    %60 = vector.broadcast %59 : vector<16x1xi1> to vector<16x64xi1>
    %61 = vector.broadcast %cst_21 : f32 to vector<16x64xf32>
    %62 = arith.select %60, %61, %58 : vector<16x64xi1>, vector<16x64xf32>
    %c15_i32_22 = arith.constant 15 : i32
    %63 = tpu.dynamic_rotate %30 by %c15_i32_22 dim 0 : vector<16x64xf32>, i32 -> vector<16x64xf32>
    %cst_23 = arith.constant 0.000000e+00 : f32
    %64 = vector.shape_cast %6 : vector<16x1xi1> to vector<16x1xi1>
    %65 = vector.broadcast %64 : vector<16x1xi1> to vector<16x64xi1>
    %66 = vector.broadcast %cst_23 : f32 to vector<16x64xf32>
    %67 = arith.select %65, %66, %63 : vector<16x64xi1>, vector<16x64xf32>
    %68 = tpu.concatenate %62, %30, %67 in 1 : vector<16x64xf32>, vector<16x64xf32>, vector<16x64xf32> -> vector<16x192xf32>
    %69 = arith.truncf %68 : vector<16x192xf32> to vector<16x192xbf16>
    %cst_24 = arith.constant dense<0.000000e+00> : vector<16x128xf32>
    %70 = tpu.matmul %69, %56, %cst_24 {dimension_numbers = #tpu.dot_dimension_numbers<[1], [0], [0], [1], [0, 0, 1, 1], [], []>} : vector<16x192xbf16>, vector<192x128xbf16>, vector<16x128xf32> -> vector<16x128xf32>
    %71 = vector.broadcast %57 : vector<1x128xf32> to vector<16x128xf32>
    %72 = arith.addf %70, %71 : vector<16x128xf32>
    %c192 = arith.constant 192 : index
    %c0_25 = arith.constant 0 : index
    %73 = vector.load %arg3[%c192, %c0_25] : memref<1152x128xbf16, #tpu.memory_space<vmem>>, vector<192x128xbf16>
    %c1_26 = arith.constant 1 : index
    %c0_27 = arith.constant 0 : index
    %74 = vector.load %arg4[%c1_26, %c0_27] : memref<4x128xf32, #tpu.memory_space<vmem>>, vector<1x128xf32>
    %c1_i32_28 = arith.constant 1 : i32
    %75 = tpu.dynamic_rotate %55 by %c1_i32_28 dim 0 : vector<16x64xf32>, i32 -> vector<16x64xf32>
    %cst_29 = arith.constant 0.000000e+00 : f32
    %76 = vector.shape_cast %4 : vector<16x1xi1> to vector<16x1xi1>
    %77 = vector.broadcast %76 : vector<16x1xi1> to vector<16x64xi1>
    %78 = vector.broadcast %cst_29 : f32 to vector<16x64xf32>
    %79 = arith.select %77, %78, %75 : vector<16x64xi1>, vector<16x64xf32>
    %c15_i32_30 = arith.constant 15 : i32
    %80 = tpu.dynamic_rotate %55 by %c15_i32_30 dim 0 : vector<16x64xf32>, i32 -> vector<16x64xf32>
    %cst_31 = arith.constant 0.000000e+00 : f32
    %81 = vector.shape_cast %6 : vector<16x1xi1> to vector<16x1xi1>
    %82 = vector.broadcast %81 : vector<16x1xi1> to vector<16x64xi1>
    %83 = vector.broadcast %cst_31 : f32 to vector<16x64xf32>
    %84 = arith.select %82, %83, %80 : vector<16x64xi1>, vector<16x64xf32>
    %85 = tpu.concatenate %79, %55, %84 in 1 : vector<16x64xf32>, vector<16x64xf32>, vector<16x64xf32> -> vector<16x192xf32>
    %86 = arith.truncf %85 : vector<16x192xf32> to vector<16x192xbf16>
    %cst_32 = arith.constant dense<0.000000e+00> : vector<16x128xf32>
    %87 = tpu.matmul %86, %73, %cst_32 {dimension_numbers = #tpu.dot_dimension_numbers<[1], [0], [0], [1], [0, 0, 1, 1], [], []>} : vector<16x192xbf16>, vector<192x128xbf16>, vector<16x128xf32> -> vector<16x128xf32>
    %88 = vector.broadcast %74 : vector<1x128xf32> to vector<16x128xf32>
    %89 = arith.addf %87, %88 : vector<16x128xf32>
    %90 = arith.truncf %89 : vector<16x128xf32> to vector<16x128xbf16>
    %cst_33 = arith.constant dense<0.000000e+00> : vector<8x128xf32>
    %91 = tpu.matmul %1, %90, %cst_33 {dimension_numbers = #tpu.dot_dimension_numbers<[0], [0], [1], [1], [0, 1, 1, 1], [], []>} : vector<16x8xbf16>, vector<16x128xbf16>, vector<8x128xf32> -> vector<8x128xf32>
    %cst_34 = arith.constant dense<0xFF800000> : vector<128xf32>
    %92 = vector.multi_reduction <maximumf>, %91, %cst_34 [0] : vector<8x128xf32> to vector<128xf32>
    %93 = vector.shape_cast %92 : vector<128xf32> to vector<1x128xf32>
    %94 = vector.broadcast %93 : vector<1x128xf32> to vector<8x128xf32>
    %95 = arith.subf %91, %94 : vector<8x128xf32>
    %96 = math.exp %95 : vector<8x128xf32>
    %cst_35 = arith.constant dense<0.000000e+00> : vector<128xf32>
    %97 = vector.multi_reduction <add>, %96, %cst_35 [0] : vector<8x128xf32> to vector<128xf32>
    %98 = vector.shape_cast %97 : vector<128xf32> to vector<1x128xf32>
    %99 = tpu.reciprocal %98 {approx = true} : vector<1x128xf32> -> vector<1x128xf32>
    %100 = vector.broadcast %99 : vector<1x128xf32> to vector<8x128xf32>
    %101 = arith.mulf %96, %100 : vector<8x128xf32>
    %102 = arith.truncf %101 : vector<8x128xf32> to vector<8x128xbf16>
    %cst_36 = arith.constant dense<0.000000e+00> : vector<16x128xf32>
    %103 = tpu.matmul %1, %102, %cst_36 {dimension_numbers = #tpu.dot_dimension_numbers<[1], [0], [0], [1], [0, 0, 1, 1], [], []>} : vector<16x8xbf16>, vector<8x128xbf16>, vector<16x128xf32> -> vector<16x128xf32>
    %c384 = arith.constant 384 : index
    %c0_37 = arith.constant 0 : index
    %104 = vector.load %arg3[%c384, %c0_37] : memref<1152x128xbf16, #tpu.memory_space<vmem>>, vector<384x128xbf16>
    %c2_38 = arith.constant 2 : index
    %c0_39 = arith.constant 0 : index
    %105 = vector.load %arg4[%c2_38, %c0_39] : memref<4x128xf32, #tpu.memory_space<vmem>>, vector<1x128xf32>
    %c1_i32_40 = arith.constant 1 : i32
    %106 = tpu.dynamic_rotate %103 by %c1_i32_40 dim 0 : vector<16x128xf32>, i32 -> vector<16x128xf32>
    %cst_41 = arith.constant 0.000000e+00 : f32
    %107 = vector.shape_cast %4 : vector<16x1xi1> to vector<16x1xi1>
    %108 = vector.broadcast %107 : vector<16x1xi1> to vector<16x128xi1>
    %109 = vector.broadcast %cst_41 : f32 to vector<16x128xf32>
    %110 = arith.select %108, %109, %106 : vector<16x128xi1>, vector<16x128xf32>
    %c15_i32_42 = arith.constant 15 : i32
    %111 = tpu.dynamic_rotate %103 by %c15_i32_42 dim 0 : vector<16x128xf32>, i32 -> vector<16x128xf32>
    %cst_43 = arith.constant 0.000000e+00 : f32
    %112 = vector.shape_cast %6 : vector<16x1xi1> to vector<16x1xi1>
    %113 = vector.broadcast %112 : vector<16x1xi1> to vector<16x128xi1>
    %114 = vector.broadcast %cst_43 : f32 to vector<16x128xf32>
    %115 = arith.select %113, %114, %111 : vector<16x128xi1>, vector<16x128xf32>
    %116 = tpu.concatenate %110, %103, %115 in 1 : vector<16x128xf32>, vector<16x128xf32>, vector<16x128xf32> -> vector<16x384xf32>
    %117 = arith.truncf %116 : vector<16x384xf32> to vector<16x384xbf16>
    %cst_44 = arith.constant dense<0.000000e+00> : vector<16x128xf32>
    %118 = tpu.matmul %117, %104, %cst_44 {dimension_numbers = #tpu.dot_dimension_numbers<[1], [0], [0], [1], [0, 0, 1, 1], [], []>} : vector<16x384xbf16>, vector<384x128xbf16>, vector<16x128xf32> -> vector<16x128xf32>
    %119 = vector.broadcast %105 : vector<1x128xf32> to vector<16x128xf32>
    %120 = arith.addf %118, %119 : vector<16x128xf32>
    %121 = arith.mulf %120, %72 : vector<16x128xf32>
    %c768 = arith.constant 768 : index
    %c0_45 = arith.constant 0 : index
    %122 = vector.load %arg3[%c768, %c0_45] : memref<1152x128xbf16, #tpu.memory_space<vmem>>, vector<384x128xbf16>
    %c3_46 = arith.constant 3 : index
    %c0_47 = arith.constant 0 : index
    %123 = vector.load %arg4[%c3_46, %c0_47] : memref<4x128xf32, #tpu.memory_space<vmem>>, vector<1x128xf32>
    %c1_i32_48 = arith.constant 1 : i32
    %124 = tpu.dynamic_rotate %121 by %c1_i32_48 dim 0 : vector<16x128xf32>, i32 -> vector<16x128xf32>
    %cst_49 = arith.constant 0.000000e+00 : f32
    %125 = vector.shape_cast %4 : vector<16x1xi1> to vector<16x1xi1>
    %126 = vector.broadcast %125 : vector<16x1xi1> to vector<16x128xi1>
    %127 = vector.broadcast %cst_49 : f32 to vector<16x128xf32>
    %128 = arith.select %126, %127, %124 : vector<16x128xi1>, vector<16x128xf32>
    %c15_i32_50 = arith.constant 15 : i32
    %129 = tpu.dynamic_rotate %121 by %c15_i32_50 dim 0 : vector<16x128xf32>, i32 -> vector<16x128xf32>
    %cst_51 = arith.constant 0.000000e+00 : f32
    %130 = vector.shape_cast %6 : vector<16x1xi1> to vector<16x1xi1>
    %131 = vector.broadcast %130 : vector<16x1xi1> to vector<16x128xi1>
    %132 = vector.broadcast %cst_51 : f32 to vector<16x128xf32>
    %133 = arith.select %131, %132, %129 : vector<16x128xi1>, vector<16x128xf32>
    %134 = tpu.concatenate %128, %121, %133 in 1 : vector<16x128xf32>, vector<16x128xf32>, vector<16x128xf32> -> vector<16x384xf32>
    %135 = arith.truncf %134 : vector<16x384xf32> to vector<16x384xbf16>
    %cst_52 = arith.constant dense<0.000000e+00> : vector<16x128xf32>
    %136 = tpu.matmul %135, %122, %cst_52 {dimension_numbers = #tpu.dot_dimension_numbers<[1], [0], [0], [1], [0, 0, 1, 1], [], []>} : vector<16x384xbf16>, vector<384x128xbf16>, vector<16x128xf32> -> vector<16x128xf32>
    %137 = vector.broadcast %123 : vector<1x128xf32> to vector<16x128xf32>
    %138 = arith.addf %136, %137 : vector<16x128xf32>
    %c0_53 = arith.constant 0 : index
    %c0_54 = arith.constant 0 : index
    %139 = vector.load %arg6[%c0_53, %c0_54] : memref<16x128xf32, #tpu.memory_space<vmem>>, vector<16x128xf32>
    tpu.vector_store %arg6[%c0_53, %c0_54], %138 {strides = array<i32>} : memref<16x128xf32, #tpu.memory_space<vmem>>, vector<16x128xf32>,
    return
  }
  func.func @transform_0(%arg0: i32) -> (i32, i32) {
    %c0_i32 = arith.constant 0 : i32
    %c0_i32_0 = arith.constant 0 : i32
    %c0_i32_1 = arith.constant 0 : i32
    return %c0_i32, %c0_i32_0 : i32, i32
  }
  func.func @transform_1(%arg0: i32) -> (i32, i32) {
    %c0_i32 = arith.constant 0 : i32
    %c0_i32_0 = arith.constant 0 : i32
    %c0_i32_1 = arith.constant 0 : i32
    return %c0_i32, %c0_i32_0 : i32, i32
  }
  func.func @transform_2(%arg0: i32) -> (i32, i32) {
    %c0_i32 = arith.constant 0 : i32
    %c0_i32_0 = arith.constant 0 : i32
    %c0_i32_1 = arith.constant 0 : i32
    return %c0_i32, %c0_i32_0 : i32, i32
  }
  func.func @transform_3(%arg0: i32) -> (i32, i32) {
    %c0_i32 = arith.constant 0 : i32
    %c0_i32_0 = arith.constant 0 : i32
    %c0_i32_1 = arith.constant 0 : i32
    return %c0_i32, %c0_i32_0 : i32, i32
  }
  func.func @transform_4(%arg0: i32) -> (i32, i32) {
    %c0_i32 = arith.constant 0 : i32
    %c0_i32_0 = arith.constant 0 : i32
    %c0_i32_1 = arith.constant 0 : i32
    return %c0_i32, %c0_i32_0 : i32, i32
  }
  func.func @transform_5(%arg0: i32) -> (i32, i32) {
    %c0_i32 = arith.constant 0 : i32
    %c0_i32_0 = arith.constant 0 : i32
    %c0_i32_1 = arith.constant 0 : i32
    return %c0_i32, %c0_i32_0 : i32, i32
  }
}

</mosaic_0001>

<llo_original>
// kernel: integral_attention_pallas.1
$region0: #{integral_attention_pallas.1}
  #allocation0 [shape = 'u32[]', space=smem, size = 0x4, offset = 0x4, fixed_abs, tag = 'smem constant byte address 0x4 - core index']
  #allocation1 [shape = 'u32[144,128]{1,0:T(1,128)}', space=vmem, size = 0x12000, scoped, tag = 'internal scratch']
  %s0 = inlined_call_operand.vmem [shape: f32[16,64], index: 0, kind: input, shape index: {}]
  %s1 = inlined_call_operand.vmem [shape: f32[16,4], index: 1, kind: input, shape index: {}]
  %s2 = inlined_call_operand.vmem [shape: bf16[1152,128], index: 2, kind: input, shape index: {}]
  %s3 = inlined_call_operand.vmem [shape: f32[4,128], index: 3, kind: input, shape index: {}]
  %s4 = inlined_call_operand.vmem [shape: bf16[16,8], index: 4, kind: input, shape index: {}]
  %s5 = inlined_call_operand.vmem [shape: f32[16,128], index: 5, kind: output, shape index: {}]
  %s6 = sld [smem:[#allocation0]]
  $region30: #{integral_attention_pallas.1} parent=0
    _
  %s8 = ssub.s32 1, %s6
  %s9 = scalar_select 0, %s8, %s6
  // Predicated region
  $region2: #{integral_attention_pallas.1} parent=0 // pred_check
    _
  $region3: #{integral_attention_pallas.1} parent=0 // pred_check_branch
    %11 = sbr.rel (0) target = $region5
  $region4: #{integral_attention_pallas.1} parent=0 // pred_region
    _
  $region5: #{integral_attention_pallas.1} parent=0 // pred_fallthru
    _
  // Predicated region
  $region6: #{integral_attention_pallas.1} parent=0 // pred_check
    _
  $region7: #{integral_attention_pallas.1} parent=0 // pred_check_branch
    %13 = sbr.rel (0) target = $region9
  $region8: #{integral_attention_pallas.1} parent=0 // pred_region
    _
  $region9: #{integral_attention_pallas.1} parent=0 // pred_fallthru
    _
  // Predicated region
  $region10: #{integral_attention_pallas.1} parent=0 // pred_check
    _
  $region11: #{integral_attention_pallas.1} parent=0 // pred_check_branch
    %15 = sbr.rel (0) target = $region13
  $region12: #{integral_attention_pallas.1} parent=0 // pred_region
    _
  $region13: #{integral_attention_pallas.1} parent=0 // pred_fallthru
    _
  // Predicated region
  $region14: #{integral_attention_pallas.1} parent=0 // pred_check
    _
  $region15: #{integral_attention_pallas.1} parent=0 // pred_check_branch
    %17 = sbr.rel (0) target = $region17
  $region16: #{integral_attention_pallas.1} parent=0 // pred_region
    _
  $region17: #{integral_attention_pallas.1} parent=0 // pred_fallthru
    _
  // Predicated region
  $region18: #{integral_attention_pallas.1} parent=0 // pred_check
    _
  $region19: #{integral_attention_pallas.1} parent=0 // pred_check_branch
    %19 = sbr.rel (0) target = $region21
  $region20: #{integral_attention_pallas.1} parent=0 // pred_region
    _
  $region21: #{integral_attention_pallas.1} parent=0 // pred_fallthru
    _
  %v21 = vld [vmem:[%s0] sm:$0xff]
  %v22 = vld [vmem:[%s0 + $0x8] sm:$0xff]
  %v23 = vld [vmem:[%s4] sm:$0xf]
  %v24 = vld [vmem:[%s4 + $0x4] sm:$0xf]
  %v25 = vlaneseq
  %v26 = vshrl.u32 %v25, 7
  %v27 = vadd.s32 %v26, 8
  %vm28 = vcmp.eq.s32.totalorder %v26, 0
  %vm29 = vcmp.eq.s32.totalorder %v27, 0
  %vm30 = vcmp.eq.s32.totalorder %v26, 15
  %vm31 = vcmp.eq.s32.totalorder %v27, 15
  %v32 = vld [vmem:[%s1] sm:$0xff]
  %v33 = vld [vmem:[%s1 + $0x8] sm:$0xff]
  %vm34 = vcmask 523264
  %v35 = vsel %vm34, %v21, 0.0
  %v36 = vsel %vm34, %v22, 0.0
  %v37 = vadd.f32 %v35, %v36
  %v38 = vrot.slane %v37, 4
  %v39 = vadd.f32 %v37, %v38
  %v40 = vrot.slane %v39, 2
  %v41 = vadd.f32 %v39, %v40
  %v42 = vrot.slane %v41, 1
  %v43 = vadd.f32 %v41, %v42
  %v44 = vrcp.pop 16.0
  %v45 = vmul.f32 %v43, %v44
  %v46 = vmul.f32 %v21, %v21
  %v47 = vmul.f32 %v22, %v22
  %v48 = vsel %vm34, %v46, 0.0
  %v49 = vsel %vm34, %v47, 0.0
  %v50 = vadd.f32 %v48, %v49
  %v51 = vrot.slane %v50, 4
  %v52 = vadd.f32 %v50, %v51
  %v53 = vrot.slane %v52, 2
  %v54 = vadd.f32 %v52, %v53
  %v55 = vrot.slane %v54, 1
  %v56 = vadd.f32 %v54, %v55
  %v57 = vmul.f32 %v56, %v44
  %v58 = vmul.f32 %v45, %v45
  %v59 = vsub.f32 %v57, %v58
  %v60 = vsub.f32 %v21, %v45
  %v61 = vsub.f32 %v22, %v45
  %v62 = vadd.f32 %v59, 1e-05
  %v63 = vrsqrt.pop %v62
  %v64 = vmul.f32 %v60, %v63
  %v65 = vmul.f32 %v61, %v63
  %67 = vset.pattern.permute.xlu0 0
  %68 = vperm.xlu0 %67, %v32
  %v69 = vpop.permute.xlu0 %68
  %72 = vset.pattern.permute.xlu0 0
  %73 = vperm.xlu0 %72, %v33
  %v74 = vpop.permute.xlu0 %73
  %v76 = vmul.f32 %v64, %v69
  %v77 = vmul.f32 %v65, %v74
  %78 = vset.pattern.permute.xlu0 1
  %79 = vperm.xlu0 %78, %v32
  %v80 = vpop.permute.xlu0 %79
  %82 = vset.pattern.permute.xlu0 1
  %83 = vperm.xlu0 %82, %v33
  %v84 = vpop.permute.xlu0 %83
  %v86 = vadd.f32 %v76, %v80
  %v87 = vadd.f32 %v77, %v84
  %v88 = vmul.f32 %v46, %v46
  %v89 = vmul.f32 %v47, %v47
  %v90 = vsel %vm34, %v88, 0.0
  %v91 = vsel %vm34, %v89, 0.0
  %v92 = vadd.f32 %v90, %v91
  %v93 = vrot.slane %v92, 4
  %v94 = vadd.f32 %v92, %v93
  %v95 = vrot.slane %v94, 2
  %v96 = vadd.f32 %v94, %v95
  %v97 = vrot.slane %v96, 1
  %v98 = vadd.f32 %v96, %v97
  %v99 = vmul.f32 %v98, %v44
  %v100 = vmul.f32 %v57, %v57
  %v101 = vsub.f32 %v99, %v100
  %v102 = vsub.f32 %v46, %v57
  %v103 = vsub.f32 %v47, %v57
  %v104 = vadd.f32 %v101, 1e-05
  %v105 = vrsqrt.pop %v104
  %v106 = vmul.f32 %v102, %v105
  %v107 = vmul.f32 %v103, %v105
  %108 = vset.pattern.permute.xlu0 2
  %109 = vperm.xlu0 %108, %v32
  %v110 = vpop.permute.xlu0 %109
  %112 = vset.pattern.permute.xlu0 2
  %113 = vperm.xlu0 %112, %v33
  %v114 = vpop.permute.xlu0 %113
  %v116 = vmul.f32 %v106, %v110
  %v117 = vmul.f32 %v107, %v114
  %118 = vset.pattern.permute.xlu0 3
  %119 = vperm.xlu0 %118, %v32
  %v120 = vpop.permute.xlu0 %119
  %122 = vset.pattern.permute.xlu0 3
  %123 = vperm.xlu0 %122, %v33
  %v124 = vpop.permute.xlu0 %123
  %v126 = vadd.f32 %v116, %v120
  %v127 = vadd.f32 %v117, %v124
  %v128 = vld [vmem:[%s2] sm:$0xf]
  %v129 = vld [vmem:[%s2 + $0x4] sm:$0xf]
  %v130 = vld [vmem:[%s2 + $0x8] sm:$0xf]
  %v131 = vld [vmem:[%s2 + $0xc] sm:$0xf]
  %v132 = vld [vmem:[%s2 + $0x10] sm:$0xf]
  %v133 = vld [vmem:[%s2 + $0x14] sm:$0xf]
  %v134 = vld [vmem:[%s2 + $0x18] sm:$0xf]
  %v135 = vld [vmem:[%s2 + $0x1c] sm:$0xf]
  %v136 = vld [vmem:[%s2 + $0x20] sm:$0xf]
  %v137 = vld [vmem:[%s2 + $0x24] sm:$0xf]
  %v138 = vld [vmem:[%s2 + $0x28] sm:$0xf]
  %v139 = vld [vmem:[%s2 + $0x2c] sm:$0xf]
  %v140 = vld [vmem:[%s2 + $0x30] sm:$0xf]
  %v141 = vld [vmem:[%s2 + $0x34] sm:$0xf]
  %v142 = vld [vmem:[%s2 + $0x38] sm:$0xf]
  %v143 = vld [vmem:[%s2 + $0x3c] sm:$0xf]
  %v144 = vld [vmem:[%s2 + $0x40] sm:$0xf]
  %v145 = vld [vmem:[%s2 + $0x44] sm:$0xf]
  %v146 = vld [vmem:[%s2 + $0x48] sm:$0xf]
  %v147 = vld [vmem:[%s2 + $0x4c] sm:$0xf]
  %v148 = vld [vmem:[%s2 + $0x50] sm:$0xf]
  %v149 = vld [vmem:[%s2 + $0x54] sm:$0xf]
  %v150 = vld [vmem:[%s2 + $0x58] sm:$0xf]
  %v151 = vld [vmem:[%s2 + $0x5c] sm:$0xf]
  %v152 = vld [vmem:[%s3] sm:$0x1]
  %v153 = vrot.slane %v86, 7
  %v154 = vrot.slane %v87, 7
  %vm155 = vcmp.lt.s32.totalorder %v26, 1
  %v156 = vsel %vm155, %v153, %v154
  %v157 = vsel %vm155, %v154, %v153
  %v158 = vsel %vm28, 1, 0
  %v159 = vsel %vm29, 1, 0
  %vm160 = vcmp.eq.s32.totalorder %v158, 1
  %vm161 = vcmp.eq.s32.totalorder %v159, 1
  %v162 = vsel %vm160, 0.0, %v157
  %v163 = vsel %vm161, 0.0, %v156
  %v164 = vrot.slane %v86, 1
  %v165 = vrot.slane %v87, 1
  %vm166 = vcmp.lt.s32.totalorder %v26, 7
  %v167 = vsel %vm166, %v164, %v165
  %v168 = vsel %vm166, %v165, %v164
  %v169 = vsel %vm30, 1, 0
  %v170 = vsel %vm31, 1, 0
  %vm171 = vcmp.eq.s32.totalorder %v169, 1
  %vm172 = vcmp.eq.s32.totalorder %v170, 1
  %v173 = vsel %vm171, 0.0, %v167
  %v174 = vsel %vm172, 0.0, %v168
  %177 = vrot.lane.b32.xlu0 %v86, 64
  %v178 = vpop.permute.xlu0 %177
  %179 = vrot.lane.b32.xlu0 %v87, 64
  %v180 = vpop.permute.xlu0 %179
  %v183 = vsel %vm34, %v162, %v178
  %v184 = vsel %vm34, %v163, %v180
  %v185 = vpack.c.bf16 %v184, %v183
  %v186 = vpack.c.bf16 %v174, %v173
  %v187 = vlaneseq
  %v188 = vshrl.u32 %v187, 7
  %v189 = vsub.s32 0, %v188
  %v190 = vrot.slane %v152, %v189
  %v215 = vunpack.c.l.b16 %v128
  %v216 = vunpack.c.l.b16 %v129
  %v217 = vunpack.c.l.b16 %v130
  %v218 = vunpack.c.l.b16 %v131
  %v219 = vunpack.c.l.b16 %v132
  %v220 = vunpack.c.l.b16 %v133
  %v221 = vunpack.c.l.b16 %v134
  %v222 = vunpack.c.l.b16 %v135
  %v223 = vunpack.c.l.b16 %v136
  %v224 = vunpack.c.l.b16 %v137
  %v225 = vunpack.c.l.b16 %v138
  %v226 = vunpack.c.l.b16 %v139
  %v227 = vunpack.c.l.b16 %v140
  %v228 = vunpack.c.l.b16 %v141
  %v229 = vunpack.c.l.b16 %v142
  %v230 = vunpack.c.l.b16 %v143
  %v231 = vunpack.c.l.b16 %v144
  %v232 = vunpack.c.l.b16 %v145
  %v233 = vunpack.c.l.b16 %v146
  %v234 = vunpack.c.l.b16 %v147
  %v235 = vunpack.c.l.b16 %v148
  %v236 = vunpack.c.l.b16 %v149
  %v237 = vunpack.c.l.b16 %v150
  %v238 = vunpack.c.l.b16 %v151
  %v239 = vpack.c.b16 %v216, %v215
  %v240 = vpack.c.b16 %v218, %v217
  %v241 = vpack.c.b16 %v220, %v219
  %v242 = vpack.c.b16 %v222, %v221
  %v243 = vpack.c.b16 %v224, %v223
  %v244 = vpack.c.b16 %v226, %v225
  %v245 = vpack.c.b16 %v228, %v227
  %v246 = vpack.c.b16 %v230, %v229
  %v247 = vpack.c.b16 %v232, %v231
  %v248 = vpack.c.b16 %v234, %v233
  %v249 = vpack.c.b16 %v236, %v235
  %v250 = vpack.c.b16 %v238, %v237
  %v264 = vsel %vm34, %v186, 0
  %266 = vmatprep.subr.bf16.mxu0 0
  %267 = vmatpush1.bf16.msra.mxu0 %v246
  %268 = vmatprep.subr.bf16.mxu0 0
  %269 = vmatpush1.bf16.msra.mxu0 %v245
  %270 = vmatprep.subr.bf16.mxu0 0
  %271 = vmatpush1.bf16.msra.mxu0 %v244
  %272 = vmatprep.subr.bf16.mxu0 0
  %273 = vmatpush1.bf16.msra.mxu0 %v243
  %274 = vmatprep.subr.bf16.mxu0 0
  %275 = vmatpush1.bf16.msra.mxu0 %v242
  %276 = vmatprep.subr.bf16.mxu0 0
  %277 = vmatpush1.bf16.msra.mxu0 %v241
  %278 = vmatprep.subr.bf16.mxu0 0
  %279 = vmatpush1.bf16.msra.mxu0 %v240
  %280 = vmatprep.subr.bf16.mxu0 0
  %281 = vmatpush1.bf16.msra.mxu0 %v239
  %282 = vmatprep.subr.bf16.mxu0 0
  %283 = vmatpush2.bf16.msra.mxu0 0
  %284 = vmatprep.subr.bf16.mxu0 0
  %285 = vmatpush2.bf16.msra.mxu0 0
  %286 = vmatprep.subr.bf16.mxu0 0
  %287 = vmatpush2.bf16.msra.mxu0 0
  %288 = vmatprep.subr.bf16.mxu0 0
  %289 = vmatpush2.bf16.msra.mxu0 0
  %290 = vmatprep.subr.bf16.mxu0 0
  %291 = vmatpush2.bf16.msra.mxu0 %v250
  %292 = vmatprep.subr.bf16.mxu0 0
  %293 = vmatpush2.bf16.msra.mxu0 %v249
  %294 = vmatprep.subr.bf16.mxu0 0
  %295 = vmatpush2.bf16.msra.mxu0 %v248
  %296 = vmatprep.subr.bf16.mxu0 0
  %297 = vmatpush2.bf16.msra.mxu0 %v247
  %298 = vmatprep.mubr.bf16.mxu0 %v264
  %299 = vmatmul.mubr.bf16.gmra.mxu0 %v185
  %v300 = vpop.f32.mrf.mxu0
  %v301 = vadd.f32 %v190, %v300
  %v302 = vpop.f32.mrf.mxu0
  %v303 = vpop.f32.mrf.mxu0
  %v304 = vadd.f32 %v190, %v303
  %v305 = vpop.f32.mrf.mxu0
  %306 = vdwg.mxu0
  %v307 = vld [vmem:[%s2 + $0x60] sm:$0xf]
  %v308 = vld [vmem:[%s2 + $0x64] sm:$0xf]
  %v309 = vld [vmem:[%s2 + $0x68] sm:$0xf]
  %v310 = vld [vmem:[%s2 + $0x6c] sm:$0xf]
  %v311 = vld [vmem:[%s2 + $0x70] sm:$0xf]
  %v312 = vld [vmem:[%s2 + $0x74] sm:$0xf]
  %v313 = vld [vmem:[%s2 + $0x78] sm:$0xf]
  %v314 = vld [vmem:[%s2 + $0x7c] sm:$0xf]
  %v315 = vld [vmem:[%s2 + $0x80] sm:$0xf]
  %v316 = vld [vmem:[%s2 + $0x84] sm:$0xf]
  %v317 = vld [vmem:[%s2 + $0x88] sm:$0xf]
  %v318 = vld [vmem:[%s2 + $0x8c] sm:$0xf]
  %v319 = vld [vmem:[%s2 + $0x90] sm:$0xf]
  %v320 = vld [vmem:[%s2 + $0x94] sm:$0xf]
  %v321 = vld [vmem:[%s2 + $0x98] sm:$0xf]
  %v322 = vld [vmem:[%s2 + $0x9c] sm:$0xf]
  %v323 = vld [vmem:[%s2 + $0xa0] sm:$0xf]
  %v324 = vld [vmem:[%s2 + $0xa4] sm:$0xf]
  %v325 = vld [vmem:[%s2 + $0xa8] sm:$0xf]
  %v326 = vld [vmem:[%s2 + $0xac] sm:$0xf]
  %v327 = vld [vmem:[%s2 + $0xb0] sm:$0xf]
  %v328 = vld [vmem:[%s2 + $0xb4] sm:$0xf]
  %v329 = vld [vmem:[%s2 + $0xb8] sm:$0xf]
  %v330 = vld [vmem:[%s2 + $0xbc] sm:$0xf]
  %v331 = vld [vmem:[%s3 + $0x1] sm:$0x1]
  %v332 = vrot.slane %v126, 7
  %v333 = vrot.slane %v127, 7
  %v334 = vsel %vm155, %v332, %v333
  %v335 = vsel %vm155, %v333, %v332
  %v336 = vsel %vm160, 0.0, %v335
  %v337 = vsel %vm161, 0.0, %v334
  %v338 = vrot.slane %v126, 1
  %v339 = vrot.slane %v127, 1
  %v340 = vsel %vm166, %v338, %v339
  %v341 = vsel %vm166, %v339, %v338
  %v342 = vsel %vm171, 0.0, %v340
  %v343 = vsel %vm172, 0.0, %v341
  %346 = vrot.lane.b32.xlu0 %v126, 64
  %v347 = vpop.permute.xlu0 %346
  %348 = vrot.lane.b32.xlu0 %v127, 64
  %v349 = vpop.permute.xlu0 %348
  %v352 = vsel %vm34, %v336, %v347
  %v353 = vsel %vm34, %v337, %v349
  %v354 = vpack.c.bf16 %v353, %v352
  %v355 = vpack.c.bf16 %v343, %v342
  %v356 = vlaneseq
  %v357 = vshrl.u32 %v356, 7
  %v358 = vsub.s32 0, %v357
  %v359 = vrot.slane %v331, %v358
  %v384 = vunpack.c.l.b16 %v307
  %v385 = vunpack.c.l.b16 %v308
  %v386 = vunpack.c.l.b16 %v309
  %v387 = vunpack.c.l.b16 %v310
  %v388 = vunpack.c.l.b16 %v311
  %v389 = vunpack.c.l.b16 %v312
  %v390 = vunpack.c.l.b16 %v313
  %v391 = vunpack.c.l.b16 %v314
  %v392 = vunpack.c.l.b16 %v315
  %v393 = vunpack.c.l.b16 %v316
  %v394 = vunpack.c.l.b16 %v317
  %v395 = vunpack.c.l.b16 %v318
  %v396 = vunpack.c.l.b16 %v319
  %v397 = vunpack.c.l.b16 %v320
  %v398 = vunpack.c.l.b16 %v321
  %v399 = vunpack.c.l.b16 %v322
  %v400 = vunpack.c.l.b16 %v323
  %v401 = vunpack.c.l.b16 %v324
  %v402 = vunpack.c.l.b16 %v325
  %v403 = vunpack.c.l.b16 %v326
  %v404 = vunpack.c.l.b16 %v327
  %v405 = vunpack.c.l.b16 %v328
  %v406 = vunpack.c.l.b16 %v329
  %v407 = vunpack.c.l.b16 %v330
  %v408 = vpack.c.b16 %v385, %v384
  %v409 = vpack.c.b16 %v387, %v386
  %v410 = vpack.c.b16 %v389, %v388
  %v411 = vpack.c.b16 %v391, %v390
  %v412 = vpack.c.b16 %v393, %v392
  %v413 = vpack.c.b16 %v395, %v394
  %v414 = vpack.c.b16 %v397, %v396
  %v415 = vpack.c.b16 %v399, %v398
  %v416 = vpack.c.b16 %v401, %v400
  %v417 = vpack.c.b16 %v403, %v402
  %v418 = vpack.c.b16 %v405, %v404
  %v419 = vpack.c.b16 %v407, %v406
  %v433 = vsel %vm34, %v355, 0
  %435 = vmatprep.subr.bf16.mxu0 0
  %436 = vmatpush1.bf16.msra.mxu0 %v415
  %437 = vmatprep.subr.bf16.mxu0 0
  %438 = vmatpush1.bf16.msra.mxu0 %v414
  %439 = vmatprep.subr.bf16.mxu0 0
  %440 = vmatpush1.bf16.msra.mxu0 %v413
  %441 = vmatprep.subr.bf16.mxu0 0
  %442 = vmatpush1.bf16.msra.mxu0 %v412
  %443 = vmatprep.subr.bf16.mxu0 0
  %444 = vmatpush1.bf16.msra.mxu0 %v411
  %445 = vmatprep.subr.bf16.mxu0 0
  %446 = vmatpush1.bf16.msra.mxu0 %v410
  %447 = vmatprep.subr.bf16.mxu0 0
  %448 = vmatpush1.bf16.msra.mxu0 %v409
  %449 = vmatprep.subr.bf16.mxu0 0
  %450 = vmatpush1.bf16.msra.mxu0 %v408
  %451 = vmatprep.subr.bf16.mxu0 0
  %452 = vmatpush2.bf16.msra.mxu0 0
  %453 = vmatprep.subr.bf16.mxu0 0
  %454 = vmatpush2.bf16.msra.mxu0 0
  %455 = vmatprep.subr.bf16.mxu0 0
  %456 = vmatpush2.bf16.msra.mxu0 0
  %457 = vmatprep.subr.bf16.mxu0 0
  %458 = vmatpush2.bf16.msra.mxu0 0
  %459 = vmatprep.subr.bf16.mxu0 0
  %460 = vmatpush2.bf16.msra.mxu0 %v419
  %461 = vmatprep.subr.bf16.mxu0 0
  %462 = vmatpush2.bf16.msra.mxu0 %v418
  %463 = vmatprep.subr.bf16.mxu0 0
  %464 = vmatpush2.bf16.msra.mxu0 %v417
  %465 = vmatprep.subr.bf16.mxu0 0
  %466 = vmatpush2.bf16.msra.mxu0 %v416
  %467 = vmatprep.mubr.bf16.mxu0 %v433
  %468 = vmatmul.mubr.bf16.gmra.mxu0 %v354
  %v469 = vpop.f32.mrf.mxu0
  %v470 = vadd.f32 %v359, %v469
  %v471 = vpop.f32.mrf.mxu0
  %v472 = vpop.f32.mrf.mxu0
  %v473 = vadd.f32 %v359, %v472
  %v474 = vpop.f32.mrf.mxu0
  %475 = vdwg.mxu0
  %v476 = vpack.c.bf16 %v473, %v470
  %v479 = vunpack.c.l.b16 %v23
  %v480 = vunpack.c.l.b16 %v24
  %v481 = vpack.c.b16 %v480, %v479
  %483 = vxpose.xlu0.c.b16.start [1/8] %v481, 128
  %484 = vxpose.xlu0.c.b16.cont [2/8] 0, 128
  %485 = vxpose.xlu0.c.b16.cont [3/8] 0, 128
  %486 = vxpose.xlu0.c.b16.cont [4/8] 0, 128
  %487 = vxpose.xlu0.c.b16.cont [5/8] 0, 128
  %488 = vxpose.xlu0.c.b16.cont [6/8] 0, 128
  %489 = vxpose.xlu0.c.b16.cont [7/8] 0, 128
  %490 = vxpose.xlu0.c.b16.end [8/8] 0, 128
  %v491 = vpop.trf.xlu0
  %v492 = vpop.trf.xlu0
  %v493 = vpop.trf.xlu0
  %v494 = vpop.trf.xlu0
  %v495 = vpop.trf.xlu0
  %v496 = vpop.trf.xlu0
  %v497 = vpop.trf.xlu0
  %v498 = vpop.trf.xlu0
  %vm499 = vcmask 130048
  %v501 = vsel %vm499, %v491, 0
  %503 = vmatprep.subr.bf16.mxu0 0
  %504 = vmatpush1.bf16.msra.mxu0 0
  %505 = vmatprep.subr.bf16.mxu0 0
  %506 = vmatpush1.bf16.msra.mxu0 0
  %507 = vmatprep.subr.bf16.mxu0 0
  %508 = vmatpush1.bf16.msra.mxu0 0
  %509 = vmatprep.subr.bf16.mxu0 0
  %510 = vmatpush1.bf16.msra.mxu0 0
  %511 = vmatprep.subr.bf16.mxu0 0
  %512 = vmatpush1.bf16.msra.mxu0 0
  %513 = vmatprep.subr.bf16.mxu0 0
  %514 = vmatpush1.bf16.msra.mxu0 0
  %515 = vmatprep.subr.bf16.mxu0 0
  %516 = vmatpush1.bf16.msra.mxu0 0
  %517 = vmatprep.subr.bf16.mxu0 0
  %518 = vmatpush1.bf16.msra.mxu0 %v476
  %519 = vmatprep.subr.bf16.mxu0 0
  %520 = vmatpush2.bf16.msra.mxu0 0
  %521 = vmatprep.subr.bf16.mxu0 0
  %522 = vmatpush2.bf16.msra.mxu0 0
  %523 = vmatprep.subr.bf16.mxu0 0
  %524 = vmatpush2.bf16.msra.mxu0 0
  %525 = vmatprep.subr.bf16.mxu0 0
  %526 = vmatpush2.bf16.msra.mxu0 0
  %527 = vmatprep.subr.bf16.mxu0 0
  %528 = vmatpush2.bf16.msra.mxu0 0
  %529 = vmatprep.subr.bf16.mxu0 0
  %530 = vmatpush2.bf16.msra.mxu0 0
  %531 = vmatprep.subr.bf16.mxu0 0
  %532 = vmatpush2.bf16.msra.mxu0 0
  %533 = vmatprep.subr.bf16.mxu0 0
  %534 = vmatpush2.bf16.msra.mxu0 0
  %535 = vmatprep.mubr.bf16.mxu0 0
  %536 = vmatmul.mubr.bf16.gmra.mxu0 %v501
  %v537 = vpop.f32.mrf.mxu0
  %v538 = vadd.f32 0.0, %v537
  %v539 = vpop.f32.mrf.mxu0
  %v540 = vpop.f32.mrf.mxu0
  %v541 = vpop.f32.mrf.mxu0
  %542 = vdwg.mxu0
  %v543 = vrot.slane %v538, 4
  %v544 = vmax.f32 %v538, %v543
  %v545 = vrot.slane %v544, 2
  %v546 = vmax.f32 %v544, %v545
  %v547 = vrot.slane %v546, 1
  %v548 = vmax.f32 %v546, %v547
  %v549 = vsub.f32 %v538, %v548
  %v550 = vmul.f32 %v549, 1.442695
  %v551 = vpow.pop %v550
  %v552 = vrot.slane %v551, 4
  %v553 = vadd.f32 %v551, %v552
  %v554 = vrot.slane %v553, 2
  %v555 = vadd.f32 %v553, %v554
  %v556 = vrot.slane %v555, 1
  %v557 = vadd.f32 %v555, %v556
  %v558 = vrcp.pop %v557
  %v559 = vmul.f32 %v551, %v558
  %v560 = vpack.c.bf16 %v559, %v559
  %vm561 = vcmask 64512
  %v563 = vsel %vm561, %v481, 0
  %vm565 = vcmask 1043456
  %v567 = vsel %vm565, %v560, 0
  %569 = vmatprep.subr.bf16.mxu0 0
  %570 = vmatpush1.bf16.msra.mxu0 0
  %571 = vmatprep.subr.bf16.mxu0 0
  %572 = vmatpush1.bf16.msra.mxu0 0
  %573 = vmatprep.subr.bf16.mxu0 0
  %574 = vmatpush1.bf16.msra.mxu0 0
  %575 = vmatprep.subr.bf16.mxu0 0
  %576 = vmatpush1.bf16.msra.mxu0 0
  %577 = vmatprep.subr.bf16.mxu0 0
  %578 = vmatpush1.bf16.msra.mxu0 0
  %579 = vmatprep.subr.bf16.mxu0 0
  %580 = vmatpush1.bf16.msra.mxu0 0
  %581 = vmatprep.subr.bf16.mxu0 0
  %582 = vmatpush1.bf16.msra.mxu0 0
  %583 = vmatprep.subr.bf16.mxu0 0
  %584 = vmatpush1.bf16.msra.mxu0 %v567
  %585 = vmatprep.subr.bf16.mxu0 0
  %586 = vmatpush2.bf16.msra.mxu0 0
  %587 = vmatprep.subr.bf16.mxu0 0
  %588 = vmatpush2.bf16.msra.mxu0 0
  %589 = vmatprep.subr.bf16.mxu0 0
  %590 = vmatpush2.bf16.msra.mxu0 0
  %591 = vmatprep.subr.bf16.mxu0 0
  %592 = vmatpush2.bf16.msra.mxu0 0
  %593 = vmatprep.subr.bf16.mxu0 0
  %594 = vmatpush2.bf16.msra.mxu0 0
  %595 = vmatprep.subr.bf16.mxu0 0
  %596 = vmatpush2.bf16.msra.mxu0 0
  %597 = vmatprep.subr.bf16.mxu0 0
  %598 = vmatpush2.bf16.msra.mxu0 0
  %599 = vmatprep.subr.bf16.mxu0 0
  %600 = vmatpush2.bf16.msra.mxu0 0
  %601 = vmatprep.mubr.bf16.mxu0 0
  %602 = vmatmul.mubr.bf16.gmra.mxu0 %v563
  %v603 = vpop.f32.mrf.mxu0
  %v604 = vadd.f32 0.0, %v603
  %v605 = vpop.f32.mrf.mxu0
  %v606 = vpop.f32.mrf.mxu0
  %v607 = vadd.f32 0.0, %v606
  %v608 = vpop.f32.mrf.mxu0
  %609 = vdwg.mxu0
  %v610 = vld [vmem:[%s2 + $0xc0] sm:$0xf]
  %v611 = vld [vmem:[%s2 + $0xc4] sm:$0xf]
  %v612 = vld [vmem:[%s2 + $0xc8] sm:$0xf]
  %v613 = vld [vmem:[%s2 + $0xcc] sm:$0xf]
  %v614 = vld [vmem:[%s2 + $0xd0] sm:$0xf]
  %v615 = vld [vmem:[%s2 + $0xd4] sm:$0xf]
  %v616 = vld [vmem:[%s2 + $0xd8] sm:$0xf]
  %v617 = vld [vmem:[%s2 + $0xdc] sm:$0xf]
  %v618 = vld [vmem:[%s2 + $0xe0] sm:$0xf]
  %v619 = vld [vmem:[%s2 + $0xe4] sm:$0xf]
  %v620 = vld [vmem:[%s2 + $0xe8] sm:$0xf]
  %v621 = vld [vmem:[%s2 + $0xec] sm:$0xf]
  %v622 = vld [vmem:[%s2 + $0xf0] sm:$0xf]
  %v623 = vld [vmem:[%s2 + $0xf4] sm:$0xf]
  %v624 = vld [vmem:[%s2 + $0xf8] sm:$0xf]
  %v625 = vld [vmem:[%s2 + $0xfc] sm:$0xf]
  %v626 = vld [vmem:[%s2 + $0x100] sm:$0xf]
  %v627 = vld [vmem:[%s2 + $0x104] sm:$0xf]
  %v628 = vld [vmem:[%s2 + $0x108] sm:$0xf]
  %v629 = vld [vmem:[%s2 + $0x10c] sm:$0xf]
  %v630 = vld [vmem:[%s2 + $0x110] sm:$0xf]
  %v631 = vld [vmem:[%s2 + $0x114] sm:$0xf]
  %v632 = vld [vmem:[%s2 + $0x118] sm:$0xf]
  %v633 = vld [vmem:[%s2 + $0x11c] sm:$0xf]
  %v634 = vld [vmem:[%s2 + $0x120] sm:$0xf]
  %v635 = vld [vmem:[%s2 + $0x124] sm:$0xf]
  %v636 = vld [vmem:[%s2 + $0x128] sm:$0xf]
  %v637 = vld [vmem:[%s2 + $0x12c] sm:$0xf]
  %v638 = vld [vmem:[%s2 + $0x130] sm:$0xf]
  %v639 = vld [vmem:[%s2 + $0x134] sm:$0xf]
  %v640 = vld [vmem:[%s2 + $0x138] sm:$0xf]
  %v641 = vld [vmem:[%s2 + $0x13c] sm:$0xf]
  %v642 = vld [vmem:[%s2 + $0x140] sm:$0xf]
  %v643 = vld [vmem:[%s2 + $0x144] sm:$0xf]
  %v644 = vld [vmem:[%s2 + $0x148] sm:$0xf]
  %v645 = vld [vmem:[%s2 + $0x14c] sm:$0xf]
  %v646 = vld [vmem:[%s2 + $0x150] sm:$0xf]
  %v647 = vld [vmem:[%s2 + $0x154] sm:$0xf]
  %v648 = vld [vmem:[%s2 + $0x158] sm:$0xf]
  %v649 = vld [vmem:[%s2 + $0x15c] sm:$0xf]
  %v650 = vld [vmem:[%s2 + $0x160] sm:$0xf]
  %v651 = vld [vmem:[%s2 + $0x164] sm:$0xf]
  %v652 = vld [vmem:[%s2 + $0x168] sm:$0xf]
  %v653 = vld [vmem:[%s2 + $0x16c] sm:$0xf]
  %v654 = vld [vmem:[%s2 + $0x170] sm:$0xf]
  %v655 = vld [vmem:[%s2 + $0x174] sm:$0xf]
  %v656 = vld [vmem:[%s2 + $0x178] sm:$0xf]
  %v657 = vld [vmem:[%s2 + $0x17c] sm:$0xf]
  %v658 = vld [vmem:[%s3 + $0x2] sm:$0x1]
  %v659 = vrot.slane %v604, 7
  %v660 = vrot.slane %v607, 7
  %v661 = vsel %vm155, %v659, %v660
  %v662 = vsel %vm155, %v660, %v659
  %v663 = vsel %vm160, 0.0, %v662
  %v664 = vsel %vm161, 0.0, %v661
  %v665 = vrot.slane %v604, 1
  %v666 = vrot.slane %v607, 1
  %v667 = vsel %vm166, %v665, %v666
  %v668 = vsel %vm166, %v666, %v665
  %v669 = vsel %vm171, 0.0, %v667
  %v670 = vsel %vm172, 0.0, %v668
  %v671 = vpack.c.bf16 %v664, %v663
  %v672 = vpack.c.bf16 %v607, %v604
  %v673 = vpack.c.bf16 %v670, %v669
  %v674 = vlaneseq
  %v675 = vshrl.u32 %v674, 7
  %v676 = vsub.s32 0, %v675
  %v677 = vrot.slane %v658, %v676
  %v726 = vunpack.c.l.b16 %v610
  %v727 = vunpack.c.l.b16 %v611
  %v728 = vunpack.c.l.b16 %v612
  %v729 = vunpack.c.l.b16 %v613
  %v730 = vunpack.c.l.b16 %v614
  %v731 = vunpack.c.l.b16 %v615
  %v732 = vunpack.c.l.b16 %v616
  %v733 = vunpack.c.l.b16 %v617
  %v734 = vunpack.c.l.b16 %v618
  %v735 = vunpack.c.l.b16 %v619
  %v736 = vunpack.c.l.b16 %v620
  %v737 = vunpack.c.l.b16 %v621
  %v738 = vunpack.c.l.b16 %v622
  %v739 = vunpack.c.l.b16 %v623
  %v740 = vunpack.c.l.b16 %v624
  %v741 = vunpack.c.l.b16 %v625
  %v742 = vunpack.c.l.b16 %v626
  %v743 = vunpack.c.l.b16 %v627
  %v744 = vunpack.c.l.b16 %v628
  %v745 = vunpack.c.l.b16 %v629
  %v746 = vunpack.c.l.b16 %v630
  %v747 = vunpack.c.l.b16 %v631
  %v748 = vunpack.c.l.b16 %v632
  %v749 = vunpack.c.l.b16 %v633
  %v750 = vunpack.c.l.b16 %v634
  %v751 = vunpack.c.l.b16 %v635
  %v752 = vunpack.c.l.b16 %v636
  %v753 = vunpack.c.l.b16 %v637
  %v754 = vunpack.c.l.b16 %v638
  %v755 = vunpack.c.l.b16 %v639
  %v756 = vunpack.c.l.b16 %v640
  %v757 = vunpack.c.l.b16 %v641
  %v758 = vunpack.c.l.b16 %v642
  %v759 = vunpack.c.l.b16 %v643
  %v760 = vunpack.c.l.b16 %v644
  %v761 = vunpack.c.l.b16 %v645
  %v762 = vunpack.c.l.b16 %v646
  %v763 = vunpack.c.l.b16 %v647
  %v764 = vunpack.c.l.b16 %v648
  %v765 = vunpack.c.l.b16 %v649
  %v766 = vunpack.c.l.b16 %v650
  %v767 = vunpack.c.l.b16 %v651
  %v768 = vunpack.c.l.b16 %v652
  %v769 = vunpack.c.l.b16 %v653
  %v770 = vunpack.c.l.b16 %v654
  %v771 = vunpack.c.l.b16 %v655
  %v772 = vunpack.c.l.b16 %v656
  %v773 = vunpack.c.l.b16 %v657
  %v774 = vpack.c.b16 %v727, %v726
  %v775 = vpack.c.b16 %v729, %v728
  %v776 = vpack.c.b16 %v731, %v730
  %v777 = vpack.c.b16 %v733, %v732
  %v778 = vpack.c.b16 %v735, %v734
  %v779 = vpack.c.b16 %v737, %v736
  %v780 = vpack.c.b16 %v739, %v738
  %v781 = vpack.c.b16 %v741, %v740
  %v782 = vpack.c.b16 %v743, %v742
  %v783 = vpack.c.b16 %v745, %v744
  %v784 = vpack.c.b16 %v747, %v746
  %v785 = vpack.c.b16 %v749, %v748
  %v786 = vpack.c.b16 %v751, %v750
  %v787 = vpack.c.b16 %v753, %v752
  %v788 = vpack.c.b16 %v755, %v754
  %v789 = vpack.c.b16 %v757, %v756
  %v790 = vpack.c.b16 %v759, %v758
  %v791 = vpack.c.b16 %v761, %v760
  %v792 = vpack.c.b16 %v763, %v762
  %v793 = vpack.c.b16 %v765, %v764
  %v794 = vpack.c.b16 %v767, %v766
  %v795 = vpack.c.b16 %v769, %v768
  %v796 = vpack.c.b16 %v771, %v770
  %v797 = vpack.c.b16 %v773, %v772
  %822 = vmatprep.subr.bf16.mxu0 0
  %823 = vmatpush1.bf16.msra.mxu0 %v781
  %824 = vmatprep.subr.bf16.mxu0 0
  %825 = vmatpush1.bf16.msra.mxu0 %v780
  %826 = vmatprep.subr.bf16.mxu0 0
  %827 = vmatpush1.bf16.msra.mxu0 %v779
  %828 = vmatprep.subr.bf16.mxu0 0
  %829 = vmatpush1.bf16.msra.mxu0 %v778
  %830 = vmatprep.subr.bf16.mxu0 0
  %831 = vmatpush1.bf16.msra.mxu0 %v777
  %832 = vmatprep.subr.bf16.mxu0 0
  %833 = vmatpush1.bf16.msra.mxu0 %v776
  %834 = vmatprep.subr.bf16.mxu0 0
  %835 = vmatpush1.bf16.msra.mxu0 %v775
  %836 = vmatprep.subr.bf16.mxu0 0
  %837 = vmatpush1.bf16.msra.mxu0 %v774
  %838 = vmatprep.subr.bf16.mxu0 0
  %839 = vmatpush2.bf16.msra.mxu0 %v789
  %840 = vmatprep.subr.bf16.mxu0 0
  %841 = vmatpush2.bf16.msra.mxu0 %v788
  %842 = vmatprep.subr.bf16.mxu0 0
  %843 = vmatpush2.bf16.msra.mxu0 %v787
  %844 = vmatprep.subr.bf16.mxu0 0
  %845 = vmatpush2.bf16.msra.mxu0 %v786
  %846 = vmatprep.subr.bf16.mxu0 0
  %847 = vmatpush2.bf16.msra.mxu0 %v785
  %848 = vmatprep.subr.bf16.mxu0 0
  %849 = vmatpush2.bf16.msra.mxu0 %v784
  %850 = vmatprep.subr.bf16.mxu0 0
  %851 = vmatpush2.bf16.msra.mxu0 %v783
  %852 = vmatprep.subr.bf16.mxu0 0
  %853 = vmatpush2.bf16.msra.mxu0 %v782
  %854 = vmatprep.mubr.bf16.mxu0 %v672
  %855 = vmatmul.mubr.bf16.gmra.mxu0 %v671
  %v856 = vpop.f32.mrf.mxu0
  %v857 = vadd.f32 %v677, %v856
  %v858 = vpop.f32.mrf.mxu0
  %v859 = vpop.f32.mrf.mxu0
  %v860 = vadd.f32 %v677, %v859
  %v861 = vpop.f32.mrf.mxu0
  %862 = vdwg.mxu0
  %863 = vmatprep.subr.bf16.mxu0 0
  %864 = vmatpush1.bf16.msra.mxu0 %v797
  %865 = vmatprep.subr.bf16.mxu0 0
  %866 = vmatpush1.bf16.msra.mxu0 %v796
  %867 = vmatprep.subr.bf16.mxu0 0
  %868 = vmatpush1.bf16.msra.mxu0 %v795
  %869 = vmatprep.subr.bf16.mxu0 0
  %870 = vmatpush1.bf16.msra.mxu0 %v794
  %871 = vmatprep.subr.bf16.mxu0 0
  %872 = vmatpush1.bf16.msra.mxu0 %v793
  %873 = vmatprep.subr.bf16.mxu0 0
  %874 = vmatpush1.bf16.msra.mxu0 %v792
  %875 = vmatprep.subr.bf16.mxu0 0
  %876 = vmatpush1.bf16.msra.mxu0 %v791
  %877 = vmatprep.subr.bf16.mxu0 0
  %878 = vmatpush1.bf16.msra.mxu0 %v790
  %879 = vmatprep.subr.bf16.mxu0 0
  %880 = vmatpush2.bf16.msra.mxu0 0
  %881 = vmatprep.subr.bf16.mxu0 0
  %882 = vmatpush2.bf16.msra.mxu0 0
  %883 = vmatprep.subr.bf16.mxu0 0
  %884 = vmatpush2.bf16.msra.mxu0 0
  %885 = vmatprep.subr.bf16.mxu0 0
  %886 = vmatpush2.bf16.msra.mxu0 0
  %887 = vmatprep.subr.bf16.mxu0 0
  %888 = vmatpush2.bf16.msra.mxu0 0
  %889 = vmatprep.subr.bf16.mxu0 0
  %890 = vmatpush2.bf16.msra.mxu0 0
  %891 = vmatprep.subr.bf16.mxu0 0
  %892 = vmatpush2.bf16.msra.mxu0 0
  %893 = vmatprep.subr.bf16.mxu0 0
  %894 = vmatpush2.bf16.msra.mxu0 0
  %895 = vmatprep.mubr.bf16.mxu0 0
  %896 = vmatmul.mubr.bf16.gmra.mxu0 %v673
  %v897 = vpop.f32.mrf.mxu0
  %v898 = vadd.f32 %v857, %v897
  %v899 = vpop.f32.mrf.mxu0
  %v900 = vpop.f32.mrf.mxu0
  %v901 = vadd.f32 %v860, %v900
  %v902 = vpop.f32.mrf.mxu0
  %903 = vdwg.mxu0
  %v904 = vmul.f32 %v898, %v301
  %v905 = vmul.f32 %v901, %v304
  %v906 = vld [vmem:[%s2 + $0x180] sm:$0xf]
  %v907 = vld [vmem:[%s2 + $0x184] sm:$0xf]
  %v908 = vld [vmem:[%s2 + $0x188] sm:$0xf]
  %v909 = vld [vmem:[%s2 + $0x18c] sm:$0xf]
  %v910 = vld [vmem:[%s2 + $0x190] sm:$0xf]
  %v911 = vld [vmem:[%s2 + $0x194] sm:$0xf]
  %v912 = vld [vmem:[%s2 + $0x198] sm:$0xf]
  %v913 = vld [vmem:[%s2 + $0x19c] sm:$0xf]
  %v914 = vld [vmem:[%s2 + $0x1a0] sm:$0xf]
  %v915 = vld [vmem:[%s2 + $0x1a4] sm:$0xf]
  %v916 = vld [vmem:[%s2 + $0x1a8] sm:$0xf]
  %v917 = vld [vmem:[%s2 + $0x1ac] sm:$0xf]
  %v918 = vld [vmem:[%s2 + $0x1b0] sm:$0xf]
  %v919 = vld [vmem:[%s2 + $0x1b4] sm:$0xf]
  %v920 = vld [vmem:[%s2 + $0x1b8] sm:$0xf]
  %v921 = vld [vmem:[%s2 + $0x1bc] sm:$0xf]
  %v922 = vld [vmem:[%s2 + $0x1c0] sm:$0xf]
  %v923 = vld [vmem:[%s2 + $0x1c4] sm:$0xf]
  %v924 = vld [vmem:[%s2 + $0x1c8] sm:$0xf]
  %v925 = vld [vmem:[%s2 + $0x1cc] sm:$0xf]
  %v926 = vld [vmem:[%s2 + $0x1d0] sm:$0xf]
  %v927 = vld [vmem:[%s2 + $0x1d4] sm:$0xf]
  %v928 = vld [vmem:[%s2 + $0x1d8] sm:$0xf]
  %v929 = vld [vmem:[%s2 + $0x1dc] sm:$0xf]
  %v930 = vld [vmem:[%s2 + $0x1e0] sm:$0xf]
  %v931 = vld [vmem:[%s2 + $0x1e4] sm:$0xf]
  %v932 = vld [vmem:[%s2 + $0x1e8] sm:$0xf]
  %v933 = vld [vmem:[%s2 + $0x1ec] sm:$0xf]
  %v934 = vld [vmem:[%s2 + $0x1f0] sm:$0xf]
  %v935 = vld [vmem:[%s2 + $0x1f4] sm:$0xf]
  %v936 = vld [vmem:[%s2 + $0x1f8] sm:$0xf]
  %v937 = vld [vmem:[%s2 + $0x1fc] sm:$0xf]
  %v938 = vld [vmem:[%s2 + $0x200] sm:$0xf]
  %v939 = vld [vmem:[%s2 + $0x204] sm:$0xf]
  %v940 = vld [vmem:[%s2 + $0x208] sm:$0xf]
  %v941 = vld [vmem:[%s2 + $0x20c] sm:$0xf]
  %v942 = vld [vmem:[%s2 + $0x210] sm:$0xf]
  %v943 = vld [vmem:[%s2 + $0x214] sm:$0xf]
  %v944 = vld [vmem:[%s2 + $0x218] sm:$0xf]
  %v945 = vld [vmem:[%s2 + $0x21c] sm:$0xf]
  %v946 = vld [vmem:[%s2 + $0x220] sm:$0xf]
  %v947 = vld [vmem:[%s2 + $0x224] sm:$0xf]
  %v948 = vld [vmem:[%s2 + $0x228] sm:$0xf]
  %v949 = vld [vmem:[%s2 + $0x22c] sm:$0xf]
  %v950 = vld [vmem:[%s2 + $0x230] sm:$0xf]
  %v951 = vld [vmem:[%s2 + $0x234] sm:$0xf]
  %v952 = vld [vmem:[%s2 + $0x238] sm:$0xf]
  %v953 = vld [vmem:[%s2 + $0x23c] sm:$0xf]
  %v954 = vld [vmem:[%s3 + $0x3] sm:$0x1]
  %v955 = vrot.slane %v904, 7
  %v956 = vrot.slane %v905, 7
  %v957 = vsel %vm155, %v955, %v956
  %v958 = vsel %vm155, %v956, %v955
  %v959 = vsel %vm160, 0.0, %v958
  %v960 = vsel %vm161, 0.0, %v957
  %v961 = vrot.slane %v904, 1
  %v962 = vrot.slane %v905, 1
  %v963 = vsel %vm166, %v961, %v962
  %v964 = vsel %vm166, %v962, %v961
  %v965 = vsel %vm171, 0.0, %v963
  %v966 = vsel %vm172, 0.0, %v964
  %v967 = vpack.c.bf16 %v960, %v959
  %v968 = vpack.c.bf16 %v905, %v904
  %v969 = vpack.c.bf16 %v966, %v965
  %v970 = vlaneseq
  %v971 = vshrl.u32 %v970, 7
  %v972 = vsub.s32 0, %v971
  %v973 = vrot.slane %v954, %v972
  %v1022 = vunpack.c.l.b16 %v906
  %v1023 = vunpack.c.l.b16 %v907
  %v1024 = vunpack.c.l.b16 %v908
  %v1025 = vunpack.c.l.b16 %v909
  %v1026 = vunpack.c.l.b16 %v910
  %v1027 = vunpack.c.l.b16 %v911
  %v1028 = vunpack.c.l.b16 %v912
  %v1029 = vunpack.c.l.b16 %v913
  %v1030 = vunpack.c.l.b16 %v914
  %v1031 = vunpack.c.l.b16 %v915
  %v1032 = vunpack.c.l.b16 %v916
  %v1033 = vunpack.c.l.b16 %v917
  %v1034 = vunpack.c.l.b16 %v918
  %v1035 = vunpack.c.l.b16 %v919
  %v1036 = vunpack.c.l.b16 %v920
  %v1037 = vunpack.c.l.b16 %v921
  %v1038 = vunpack.c.l.b16 %v922
  %v1039 = vunpack.c.l.b16 %v923
  %v1040 = vunpack.c.l.b16 %v924
  %v1041 = vunpack.c.l.b16 %v925
  %v1042 = vunpack.c.l.b16 %v926
  %v1043 = vunpack.c.l.b16 %v927
  %v1044 = vunpack.c.l.b16 %v928
  %v1045 = vunpack.c.l.b16 %v929
  %v1046 = vunpack.c.l.b16 %v930
  %v1047 = vunpack.c.l.b16 %v931
  %v1048 = vunpack.c.l.b16 %v932
  %v1049 = vunpack.c.l.b16 %v933
  %v1050 = vunpack.c.l.b16 %v934
  %v1051 = vunpack.c.l.b16 %v935
  %v1052 = vunpack.c.l.b16 %v936
  %v1053 = vunpack.c.l.b16 %v937
  %v1054 = vunpack.c.l.b16 %v938
  %v1055 = vunpack.c.l.b16 %v939
  %v1056 = vunpack.c.l.b16 %v940
  %v1057 = vunpack.c.l.b16 %v941
  %v1058 = vunpack.c.l.b16 %v942
  %v1059 = vunpack.c.l.b16 %v943
  %v1060 = vunpack.c.l.b16 %v944
  %v1061 = vunpack.c.l.b16 %v945
  %v1062 = vunpack.c.l.b16 %v946
  %v1063 = vunpack.c.l.b16 %v947
  %v1064 = vunpack.c.l.b16 %v948
  %v1065 = vunpack.c.l.b16 %v949
  %v1066 = vunpack.c.l.b16 %v950
  %v1067 = vunpack.c.l.b16 %v951
  %v1068 = vunpack.c.l.b16 %v952
  %v1069 = vunpack.c.l.b16 %v953
  %v1070 = vpack.c.b16 %v1023, %v1022
  %v1071 = vpack.c.b16 %v1025, %v1024
  %v1072 = vpack.c.b16 %v1027, %v1026
  %v1073 = vpack.c.b16 %v1029, %v1028
  %v1074 = vpack.c.b16 %v1031, %v1030
  %v1075 = vpack.c.b16 %v1033, %v1032
  %v1076 = vpack.c.b16 %v1035, %v1034
  %v1077 = vpack.c.b16 %v1037, %v1036
  %v1078 = vpack.c.b16 %v1039, %v1038
  %v1079 = vpack.c.b16 %v1041, %v1040
  %v1080 = vpack.c.b16 %v1043, %v1042
  %v1081 = vpack.c.b16 %v1045, %v1044
  %v1082 = vpack.c.b16 %v1047, %v1046
  %v1083 = vpack.c.b16 %v1049, %v1048
  %v1084 = vpack.c.b16 %v1051, %v1050
  %v1085 = vpack.c.b16 %v1053, %v1052
  %v1086 = vpack.c.b16 %v1055, %v1054
  %v1087 = vpack.c.b16 %v1057, %v1056
  %v1088 = vpack.c.b16 %v1059, %v1058
  %v1089 = vpack.c.b16 %v1061, %v1060
  %v1090 = vpack.c.b16 %v1063, %v1062
  %v1091 = vpack.c.b16 %v1065, %v1064
  %v1092 = vpack.c.b16 %v1067, %v1066
  %v1093 = vpack.c.b16 %v1069, %v1068
  %1118 = vmatprep.subr.bf16.mxu0 0
  %1119 = vmatpush1.bf16.msra.mxu0 %v1077
  %1120 = vmatprep.subr.bf16.mxu0 0
  %1121 = vmatpush1.bf16.msra.mxu0 %v1076
  %1122 = vmatprep.subr.bf16.mxu0 0
  %1123 = vmatpush1.bf16.msra.mxu0 %v1075
  %1124 = vmatprep.subr.bf16.mxu0 0
  %1125 = vmatpush1.bf16.msra.mxu0 %v1074
  %1126 = vmatprep.subr.bf16.mxu0 0
  %1127 = vmatpush1.bf16.msra.mxu0 %v1073
  %1128 = vmatprep.subr.bf16.mxu0 0
  %1129 = vmatpush1.bf16.msra.mxu0 %v1072
  %1130 = vmatprep.subr.bf16.mxu0 0
  %1131 = vmatpush1.bf16.msra.mxu0 %v1071
  %1132 = vmatprep.subr.bf16.mxu0 0
  %1133 = vmatpush1.bf16.msra.mxu0 %v1070
  %1134 = vmatprep.subr.bf16.mxu0 0
  %1135 = vmatpush2.bf16.msra.mxu0 %v1085
  %1136 = vmatprep.subr.bf16.mxu0 0
  %1137 = vmatpush2.bf16.msra.mxu0 %v1084
  %1138 = vmatprep.subr.bf16.mxu0 0
  %1139 = vmatpush2.bf16.msra.mxu0 %v1083
  %1140 = vmatprep.subr.bf16.mxu0 0
  %1141 = vmatpush2.bf16.msra.mxu0 %v1082
  %1142 = vmatprep.subr.bf16.mxu0 0
  %1143 = vmatpush2.bf16.msra.mxu0 %v1081
  %1144 = vmatprep.subr.bf16.mxu0 0
  %1145 = vmatpush2.bf16.msra.mxu0 %v1080
  %1146 = vmatprep.subr.bf16.mxu0 0
  %1147 = vmatpush2.bf16.msra.mxu0 %v1079
  %1148 = vmatprep.subr.bf16.mxu0 0
  %1149 = vmatpush2.bf16.msra.mxu0 %v1078
  %1150 = vmatprep.mubr.bf16.mxu0 %v968
  %1151 = vmatmul.mubr.bf16.gmra.mxu0 %v967
  %v1152 = vpop.f32.mrf.mxu0
  %v1153 = vadd.f32 %v973, %v1152
  %v1154 = vpop.f32.mrf.mxu0
  %v1155 = vpop.f32.mrf.mxu0
  %v1156 = vadd.f32 %v973, %v1155
  %v1157 = vpop.f32.mrf.mxu0
  %1158 = vdwg.mxu0
  %1159 = vmatprep.subr.bf16.mxu0 0
  %1160 = vmatpush1.bf16.msra.mxu0 %v1093
  %1161 = vmatprep.subr.bf16.mxu0 0
  %1162 = vmatpush1.bf16.msra.mxu0 %v1092
  %1163 = vmatprep.subr.bf16.mxu0 0
  %1164 = vmatpush1.bf16.msra.mxu0 %v1091
  %1165 = vmatprep.subr.bf16.mxu0 0
  %1166 = vmatpush1.bf16.msra.mxu0 %v1090
  %1167 = vmatprep.subr.bf16.mxu0 0
  %1168 = vmatpush1.bf16.msra.mxu0 %v1089
  %1169 = vmatprep.subr.bf16.mxu0 0
  %1170 = vmatpush1.bf16.msra.mxu0 %v1088
  %1171 = vmatprep.subr.bf16.mxu0 0
  %1172 = vmatpush1.bf16.msra.mxu0 %v1087
  %1173 = vmatprep.subr.bf16.mxu0 0
  %1174 = vmatpush1.bf16.msra.mxu0 %v1086
  %1175 = vmatprep.subr.bf16.mxu0 0
  %1176 = vmatpush2.bf16.msra.mxu0 0
  %1177 = vmatprep.subr.bf16.mxu0 0
  %1178 = vmatpush2.bf16.msra.mxu0 0
  %1179 = vmatprep.subr.bf16.mxu0 0
  %1180 = vmatpush2.bf16.msra.mxu0 0
  %1181 = vmatprep.subr.bf16.mxu0 0
  %1182 = vmatpush2.bf16.msra.mxu0 0
  %1183 = vmatprep.subr.bf16.mxu0 0
  %1184 = vmatpush2.bf16.msra.mxu0 0
  %1185 = vmatprep.subr.bf16.mxu0 0
  %1186 = vmatpush2.bf16.msra.mxu0 0
  %1187 = vmatprep.subr.bf16.mxu0 0
  %1188 = vmatpush2.bf16.msra.mxu0 0
  %1189 = vmatprep.subr.bf16.mxu0 0
  %1190 = vmatpush2.bf16.msra.mxu0 0
  %1191 = vmatprep.mubr.bf16.mxu0 0
  %1192 = vmatmul.mubr.bf16.gmra.mxu0 %v969
  %v1193 = vpop.f32.mrf.mxu0
  %v1194 = vadd.f32 %v1153, %v1193
  %v1195 = vpop.f32.mrf.mxu0
  %v1196 = vpop.f32.mrf.mxu0
  %v1197 = vadd.f32 %v1156, %v1196
  %v1198 = vpop.f32.mrf.mxu0
  %1199 = vdwg.mxu0
  %1200 = vst [vmem:[%s5] sm:$0xff] %v1194
  %1201 = vst [vmem:[%s5 + $0x8] sm:$0xff] %v1197
  // Predicated region
  $region22: #{integral_attention_pallas.1} parent=0 // pred_check
    _
  $region23: #{integral_attention_pallas.1} parent=0 // pred_check_branch
    %1203 = sbr.rel (0) target = $region25
  $region24: #{integral_attention_pallas.1} parent=0 // pred_region
    _
  $region25: #{integral_attention_pallas.1} parent=0 // pred_fallthru
    _
  // Predicated region
  $region26: #{integral_attention_pallas.1} parent=0 // pred_check
    _
  $region27: #{integral_attention_pallas.1} parent=0 // pred_check_branch
    %1205 = sbr.rel (0) target = $region29
  $region28: #{integral_attention_pallas.1} parent=0 // pred_region
    _
  $region29: #{integral_attention_pallas.1} parent=0 // pred_fallthru
    _

</llo_original>
